<compile_context>
chip_gen: v7x
topology: tpu7x:2x2x1
jax: 0.10.0
libtpu: 0.0.40
codegen_flags: <defaults>
</compile_context>

<pallas_src>
import jax
import jax.numpy as jnp
from jax import lax
from jax.experimental import pallas as pl
from jax.experimental.pallas import tpu as pltpu


def conv3x3_relu_kernel(p_ref, w_ref, b_ref, o_ref):
    # p_ref: (1, K, TM)    f32 im2col patches, pixels on the lane axis
    # w_ref: (Cout, K)     f32 flattened conv weights (resident across grid)
    # b_ref: (Cout, 1)     f32 bias (resident across grid)
    # o_ref: (1, Cout, TM) f32 output tile (lane-dense, already NCHW-flattened)
    acc = jnp.dot(w_ref[...], p_ref[0], preferred_element_type=jnp.float32)
    o_ref[0] = jnp.maximum(acc + b_ref[...], 0.0).astype(o_ref.dtype)


def _pick_tile_h(H, W, *, max_pixels=8192):
    """Largest divisor of H whose pixel tile is lane-aligned and <= max_pixels."""
    divs = [th for th in range(1, H + 1) if H % th == 0]
    fitting = [th for th in divs if th * W <= max_pixels]
    if not fitting:
        return divs[0]  # fall back to single-row tiles at huge W
    aligned = [th for th in fitting if (th * W) % 128 == 0]
    return max(aligned) if aligned else max(fitting)


def single_conv_forward(x_nchw, w_hwio, bias, *, tile_h=None):
    """x_nchw: (B, Cin, H, W); w_hwio: (3, 3, Cin, Cout); bias: (Cout,)."""
    B, Cin, H, W = x_nchw.shape
    Cout = w_hwio.shape[-1]
    K = 9 * Cin

    # --- wrapper glue: halo pad + transposed im2col, stays NCHW (fused by XLA) ---
    x_pad = jnp.pad(x_nchw, ((0, 0), (0, 0), (1, 1), (1, 1)))        # zero halo
    taps = [x_pad[:, :, kh:kh + H, kw:kw + W]
            for kh in range(3) for kw in range(3)]                   # 9 x (B,Cin,H,W)
    patches_t = (jnp.concatenate(taps, axis=1)                       # (B,9*Cin,H,W)
                 .reshape(B, K, H * W)
                 .astype(jnp.float32))                               # pixels on lanes
    # Weight matrix (Cout, K) with K ordered (kh, kw, ci) to match the taps.
    w_mat = jnp.transpose(w_hwio, (3, 0, 1, 2)).reshape(Cout, K).astype(jnp.float32)
    b2 = bias.reshape(Cout, 1).astype(jnp.float32)

    # Tiling: big lane-aligned pixel tiles, >=2 "parallel" steps (B axis) for v7x.
    if tile_h is None:
        tile_h = _pick_tile_h(H, W)
    assert H % tile_h == 0
    tm = tile_h * W                                                  # pixels per step
    grid = (B, H // tile_h)

    # VMEM limit derived from actual block sizes (v7x has only 64 MiB per TC).
    block_bytes = 4 * tm * (K + Cout)           # one patch block + one output block
    resident_bytes = 4 * (Cout * K + Cout)      # weights + bias (constant index map)
    vmem_limit = 2 * block_bytes + 2 * resident_bytes + (2 << 20)    # dbl-buf + slack
    vmem_limit = int(min(max(vmem_limit, 4 << 20), 64 << 20))

    out_flat = pl.pallas_call(
        conv3x3_relu_kernel,
        out_shape=jax.ShapeDtypeStruct((B, Cout, H * W), jnp.float32),
        grid=grid,
        in_specs=[
            pl.BlockSpec((1, K, tm), lambda b, t: (b, 0, t)),
            pl.BlockSpec((Cout, K), lambda b, t: (0, 0)),
            pl.BlockSpec((Cout, 1), lambda b, t: (0, 0)),
        ],
        out_specs=pl.BlockSpec((1, Cout, tm), lambda b, t: (b, 0, t)),
        compiler_params=pltpu.CompilerParams(
            dimension_semantics=("parallel", "parallel"),
            vmem_limit_bytes=vmem_limit),
    )(patches_t, w_mat, b2)

    # Output is already NCHW-flattened: just restore the spatial dims.
    return out_flat.reshape(B, Cout, H, W)


def init_params(key, in_ch, out_ch):
    # Deterministic init mimicking PyTorch Conv2d default (kaiming-uniform-ish).
    kw_key, b_key = jax.random.split(key)
    fan_in = in_ch * 3 * 3
    bound = 1.0 / jnp.sqrt(fan_in)
    w_hwio = jax.random.uniform(
        kw_key, (3, 3, in_ch, out_ch), jnp.float32, -bound, bound)
    bias = jax.random.uniform(b_key, (out_ch,), jnp.float32, -bound, bound)
    return w_hwio, bias


if __name__ == "__main__":
    key = jax.random.PRNGKey(0)
    x_key, p_key = jax.random.split(key)

    B, Cin, H, W = 2, 4, 16, 16
    Cout = 8

    x = jax.random.normal(x_key, (B, Cin, H, W), jnp.float32)        # NCHW
    w_hwio, bias = init_params(p_key, Cin, Cout)

    out = jax.block_until_ready(single_conv_forward(x, w_hwio, bias))

    # Silent correctness check against XLA's f32 conv (kernel is f32 end-to-end;
    # tolerance covers MXU multi-pass f32 accumulation differences).
    ref = lax.conv_general_dilated(
        x, jnp.transpose(w_hwio, (3, 2, 0, 1)),                      # OIHW
        window_strides=(1, 1), padding=((1, 1), (1, 1)),
        dimension_numbers=("NCHW", "OIHW", "NCHW"),
        precision=lax.Precision.HIGHEST)
    ref = jnp.maximum(ref + bias[None, :, None, None], 0.0)

    assert out.shape == (B, Cout, H, W)
    assert jnp.allclose(out, ref, atol=5e-2, rtol=5e-2), \
        float(jnp.max(jnp.abs(out - ref)))

    print("KERNEL_OK")
</pallas_src>

<mosaic_0001>
module attributes {stable_mosaic.version = 11 : i64} {
  func.func @conv3x3_relu_kernel(%arg0: i32, %arg1: i32, %arg2: memref<1x36x256xf32, #tpu.memory_space<vmem>>, %arg3: memref<8x36xf32, #tpu.memory_space<vmem>>, %arg4: memref<8x1xf32, #tpu.memory_space<vmem>>, %arg5: memref<1x8x256xf32, #tpu.memory_space<vmem>>) attributes {dimension_semantics = [#tpu.dimension_semantics<parallel>, #tpu.dimension_semantics<parallel>], iteration_bounds = array<i64: 2, 1>, scalar_prefetch = 0 : i64, scratch_operands = 0 : i64, tpu.core_type = #tpu.core_type<tc>, window_params = [{transform_indices = @transform_0, window_bounds = array<i64: 1, 36, 256>}, {pipeline_mode = #tpu.pipeline_mode<synchronous>, transform_indices = @transform_1, window_bounds = array<i64: 8, 36>}, {pipeline_mode = #tpu.pipeline_mode<synchronous>, transform_indices = @transform_2, window_bounds = array<i64: 8, 1>}, {transform_indices = @transform_3, window_bounds = array<i64: 1, 8, 256>}]} {
    %c0 = arith.constant 0 : index
    %c0_0 = arith.constant 0 : index
    %0 = vector.load %arg3[%c0, %c0_0] : memref<8x36xf32, #tpu.memory_space<vmem>>, vector<8x36xf32>
    %c0_1 = arith.constant 0 : index
    %c0_2 = arith.constant 0 : index
    %c0_3 = arith.constant 0 : index
    %1 = vector.load %arg2[%c0_1, %c0_2, %c0_3] : memref<1x36x256xf32, #tpu.memory_space<vmem>>, vector<1x36x256xf32>
    %2 = vector.shape_cast %1 : vector<1x36x256xf32> to vector<36x256xf32>
    %cst = arith.constant dense<0.000000e+00> : vector<8x256xf32>
    %3 = tpu.matmul %0, %2, %cst {dimension_numbers = #tpu.dot_dimension_numbers<[1], [0], [0], [1], [0, 0, 1, 1], [], []>} : vector<8x36xf32>, vector<36x256xf32>, vector<8x256xf32> -> vector<8x256xf32>
    %c0_4 = arith.constant 0 : index
    %c0_5 = arith.constant 0 : index
    %4 = vector.load %arg4[%c0_4, %c0_5] : memref<8x1xf32, #tpu.memory_space<vmem>>, vector<8x1xf32>
    %5 = vector.broadcast %4 : vector<8x1xf32> to vector<8x256xf32>
    %6 = arith.addf %3, %5 : vector<8x256xf32>
    %cst_6 = arith.constant 0.000000e+00 : f32
    %7 = vector.broadcast %cst_6 : f32 to vector<8x256xf32>
    %8 = arith.maximumf %6, %7 : vector<8x256xf32>
    %c0_7 = arith.constant 0 : index
    %c0_8 = arith.constant 0 : index
    %c0_9 = arith.constant 0 : index
    %9 = vector.load %arg5[%c0_7, %c0_8, %c0_9] : memref<1x8x256xf32, #tpu.memory_space<vmem>>, vector<1x8x256xf32>
    %10 = vector.shape_cast %9 : vector<1x8x256xf32> to vector<8x256xf32>
    %11 = vector.shape_cast %8 : vector<8x256xf32> to vector<1x8x256xf32>
    tpu.vector_store %arg5[%c0_7, %c0_8, %c0_9], %11 {strides = array<i32>} : memref<1x8x256xf32, #tpu.memory_space<vmem>>, vector<1x8x256xf32>,
    return
  }
  func.func @transform_0(%arg0: i32, %arg1: i32) -> (i32, i32, i32) {
    %c0_i32 = arith.constant 0 : i32
    %c0_i32_0 = arith.constant 0 : i32
    return %arg0, %c0_i32, %arg1 : i32, i32, i32
  }
  func.func @transform_1(%arg0: i32, %arg1: i32) -> (i32, i32) {
    %c0_i32 = arith.constant 0 : i32
    %c0_i32_0 = arith.constant 0 : i32
    %c0_i32_1 = arith.constant 0 : i32
    return %c0_i32, %c0_i32_0 : i32, i32
  }
  func.func @transform_2(%arg0: i32, %arg1: i32) -> (i32, i32) {
    %c0_i32 = arith.constant 0 : i32
    %c0_i32_0 = arith.constant 0 : i32
    %c0_i32_1 = arith.constant 0 : i32
    return %c0_i32, %c0_i32_0 : i32, i32
  }
  func.func @transform_3(%arg0: i32, %arg1: i32) -> (i32, i32, i32) {
    %c0_i32 = arith.constant 0 : i32
    %c0_i32_0 = arith.constant 0 : i32
    return %arg0, %c0_i32, %arg1 : i32, i32, i32
  }
}

</mosaic_0001>

<llo_original>
// kernel: tpu_custom_call.1
$region0: #{tpu_custom_call.1}
  #allocation0 [shape = 'u32[]', space=smem, size = 0x4, offset = 0x4, fixed_abs, tag = 'smem constant byte address 0x4 - core index']
  #allocation1 [shape = 'u32[144,128]{1,0:T(1,128)}', space=vmem, size = 0x12000, scoped, tag = 'internal scratch']
  %s0 = inlined_call_operand.vmem [shape: f32[2,36,256], index: 0, kind: input, shape index: {}]
  %s1 = inlined_call_operand.vmem [shape: f32[8,36], index: 1, kind: input, shape index: {}]
  %s2 = inlined_call_operand.vmem [shape: f32[8,1], index: 2, kind: input, shape index: {}]
  %s3 = inlined_call_operand.hbm [shape: f32[2,8,256], index: 3, kind: output, shape index: {}]
  %s4 = sld [smem:[#allocation0]]
  $region45: #{tpu_custom_call.1} parent=0
    _
  %s6 = ssub.s32 1, %s4
  %s7 = scalar_select 0, %s6, %s4
  $region1: #{tpu_custom_call.1} parent=0
    #allocation2 [shape = 'u8[16384]{0}', space=vmem, size = 0x4000, scoped, tag = 'output window, operand 0']
    #allocation3 [shape = 's32[2]{0}', space=sflag, size = 0x8, scoped, tag = 'scoped memory for tpu_custom_call.1']
    %8 = vsyncpa [#allocation3], 0
    %s9 = scalar_lea.sflag [#allocation3], 1
    %10 = vsyncpa %s9, 0
    loop: start=0, step=1, limit=4
    $region2: #{tpu_custom_call.1} parent=1 // loop_pre_header
      _
    $region3: #{tpu_custom_call.1} parent=1 // loop_header
      %s12 = sphi 0, %s16
      %p13 = scmp.ge.s32.totalorder %s12, 4
      %s19 = sphi 0, %s31
      %s20 = sphi 0, %s27
      %s21 = sphi 0, %s19
      %s22 = sphi 0, %s20
      %s23 = sphi 0, %s21
      %s24 = sphi 0, %s22
      %s36 = sphi 0, %s38
      %s39 = sphi 0, %s36
      %s40 = sphi 0, %s39
      %s56 = sphi 0, %s40
      %s60 = sphi 0, %s60
      %s62 = sphi 0, %s60
      %s63 = sphi 0, %s62
      %s77 = sphi 0, %s63
      %s81 = sphi 0, %s81
      %s83 = sphi 0, %s81
      %s84 = sphi 0, %s83
      %s98 = sphi 0, %s84
      %s106 = sphi 0, %s108
      %s109 = sphi 0, %s106
      %s110 = sphi 0, %s109
      %s126 = sphi 0, %s110
    $region4: #{tpu_custom_call.1} parent=1 // loop_header_branch
      %15 = sbr.rel (%p13) target = $region8
    $region5: #{tpu_custom_call.1} parent=1 // loop_body
      %s17 = ssub.s32 %s12, 1
      %s18 = ssub.s32 %s12, 2
      %s25 = sadd.s32 1, %s20
      %p26 = scmp.ge.s32.totalorder %s25, 1
      %s27 = scalar_select %p26, 0, %s25
      %s28 = sadd.s32 1, %s19
      %s29 = scalar_select %p26, %s28, %s19
      %p30 = scmp.ge.s32.totalorder %s29, 2
      %s31 = scalar_select %p30, 0, %s29
      %s32 = ssub.s32 %s19, %s31
      %s33 = ssub.s32 %s20, %s27
      %s34 = sor.u32 %s32, %s33
      %p35 = scmp.eq.s32.totalorder %s34, 0
      %s37 = sadd.s32 %s36, 1
      %s38 = scalar_select %p35, %s36, %s37
      %p41 = pneg %p35
      %p42 = scmp.eq.s32.totalorder %s12, 1
      %p43 = por %p41, %p42
      %p44 = scmp.ne.s32.totalorder %s36, %s39
      %p45 = scmp.eq.s32.totalorder %s12, 0
      %p46 = por %p44, %p45
      %p47 = scmp.ne.s32.totalorder %s36, %s39
      %p48 = scmp.eq.s32.totalorder %s17, 1
      %p49 = por %p47, %p48
      %p50 = scmp.ne.s32.totalorder %s39, %s40
      %p51 = scmp.eq.s32.totalorder %s17, 0
      %p52 = por %p50, %p51
      %p53 = scmp.ne.s32.totalorder %s39, %s40
      %p54 = scmp.eq.s32.totalorder %s18, 1
      %p55 = por %p53, %p54
      %p57 = scmp.ne.s32.totalorder %s40, %s56
      %p58 = scmp.eq.s32.totalorder %s18, 0
      %p59 = por %p57, %p58
      %s61 = sadd.s32 %s60, 1
      %p64 = scmp.eq.s32.totalorder %s12, 1
      %p65 = scmp.ne.s32.totalorder %s60, %s62
      %p66 = scmp.eq.s32.totalorder %s12, 0
      %p67 = por %p65, %p66
      %p68 = scmp.ne.s32.totalorder %s60, %s62
      %p69 = scmp.eq.s32.totalorder %s17, 1
      %p70 = por %p68, %p69
      %p71 = scmp.ne.s32.totalorder %s62, %s63
      %p72 = scmp.eq.s32.totalorder %s17, 0
      %p73 = por %p71, %p72
      %p74 = scmp.ne.s32.totalorder %s62, %s63
      %p75 = scmp.eq.s32.totalorder %s18, 1
      %p76 = por %p74, %p75
      %p78 = scmp.ne.s32.totalorder %s63, %s77
      %p79 = scmp.eq.s32.totalorder %s18, 0
      %p80 = por %p78, %p79
      %s82 = sadd.s32 %s81, 1
      %p85 = scmp.eq.s32.totalorder %s12, 1
      %p86 = scmp.ne.s32.totalorder %s81, %s83
      %p87 = scmp.eq.s32.totalorder %s12, 0
      %p88 = por %p86, %p87
      %p89 = scmp.ne.s32.totalorder %s81, %s83
      %p90 = scmp.eq.s32.totalorder %s17, 1
      %p91 = por %p89, %p90
      %p92 = scmp.ne.s32.totalorder %s83, %s84
      %p93 = scmp.eq.s32.totalorder %s17, 0
      %p94 = por %p92, %p93
      %p95 = scmp.ne.s32.totalorder %s83, %s84
      %p96 = scmp.eq.s32.totalorder %s18, 1
      %p97 = por %p95, %p96
      %p99 = scmp.ne.s32.totalorder %s84, %s98
      %p100 = scmp.eq.s32.totalorder %s18, 0
      %p101 = por %p99, %p100
      %s102 = ssub.s32 %s19, %s31
      %s103 = ssub.s32 %s20, %s27
      %s104 = sor.u32 %s102, %s103
      %p105 = scmp.eq.s32.totalorder %s104, 0
      %s107 = sadd.s32 %s106, 1
      %s108 = scalar_select %p105, %s106, %s107
      %p111 = pneg %p105
      %p112 = scmp.eq.s32.totalorder %s12, 1
      %p113 = por %p111, %p112
      %p114 = scmp.ne.s32.totalorder %s106, %s109
      %p115 = scmp.eq.s32.totalorder %s12, 0
      %p116 = por %p114, %p115
      %p117 = scmp.ne.s32.totalorder %s106, %s109
      %p118 = scmp.eq.s32.totalorder %s17, 1
      %p119 = por %p117, %p118
      %p120 = scmp.ne.s32.totalorder %s109, %s110
      %p121 = scmp.eq.s32.totalorder %s17, 0
      %p122 = por %p120, %p121
      %p123 = scmp.ne.s32.totalorder %s109, %s110
      %p124 = scmp.eq.s32.totalorder %s18, 1
      %p125 = por %p123, %p124
      %p127 = scmp.ne.s32.totalorder %s110, %s126
      %p128 = scmp.eq.s32.totalorder %s18, 0
      %p129 = por %p127, %p128
      %p130 = scmp.le.s32.totalorder 1, %s12
      %p131 = scmp.lt.s32.totalorder %s12, 3
      %p132 = pnand %p130, %p131
      %p133 = pneg %p132
      // Predicated region
      $region9: #{tpu_custom_call.1} parent=5 // pred_check
        _
      $region10: #{tpu_custom_call.1} parent=5 // pred_check_branch
        %135 = sbr.rel (%p132) target = $region12
      $region11: #{tpu_custom_call.1} parent=5 // pred_region
        %s136 = ssub.s32 %s12, 1
        // Predicated region
        $region13: #{tpu_custom_call.1} parent=11 // pred_check
          %p137 = pneg %p73
        $region14: #{tpu_custom_call.1} parent=11 // pred_check_branch
          %139 = sbr.rel (%p137) target = $region16
        $region15: #{tpu_custom_call.1} parent=11 // pred_region
          _
        $region16: #{tpu_custom_call.1} parent=11 // pred_fallthru
          _
        // Predicated region
        $region17: #{tpu_custom_call.1} parent=11 // pred_check
          %p140 = pneg %p94
        $region18: #{tpu_custom_call.1} parent=11 // pred_check_branch
          %142 = sbr.rel (%p140) target = $region20
        $region19: #{tpu_custom_call.1} parent=11 // pred_region
          _
        $region20: #{tpu_custom_call.1} parent=11 // pred_fallthru
          _
      $region12: #{tpu_custom_call.1} parent=5 // pred_fallthru
        _
      %p143 = scmp.lt.s32.totalorder %s12, 2
      // Predicated region
      $region21: #{tpu_custom_call.1} parent=5 // pred_check
        %p144 = pneg %p143
      $region22: #{tpu_custom_call.1} parent=5 // pred_check_branch
        %146 = sbr.rel (%p144) target = $region24
      $region23: #{tpu_custom_call.1} parent=5 // pred_region
        // Predicated region
        $region25: #{tpu_custom_call.1} parent=23 // pred_check
          %p147 = pneg %p46
        $region26: #{tpu_custom_call.1} parent=23 // pred_check_branch
          %149 = sbr.rel (%p147) target = $region28
        $region27: #{tpu_custom_call.1} parent=23 // pred_region
          %s150 = smul.u32 2, %s20
          %p151 = scmp.lt.s32.totalorder %s19, 1
          %s152 = scalar_select %p151, %s19, 1
          %p153 = scmp.lt.s32.totalorder %s150, 1
          %s154 = scalar_select %p153, %s150, 1
          %s155 = smul.addr %s152, 10
          %s156 = sadd.s32 %s154, %s155
          %s157 = smul.addr %s156, 8
          %s158 = scalar_lea.vmem %s0, %s157
          %s159 = smul.u32 2, %s20
        $region28: #{tpu_custom_call.1} parent=23 // pred_fallthru
          _
      $region24: #{tpu_custom_call.1} parent=5 // pred_fallthru
        _
      %p160 = scmp.le.s32.totalorder 1, %s12
      %p161 = scmp.lt.s32.totalorder %s12, 3
      %p162 = pnand %p160, %p161
      %p163 = pneg %p162
      // Predicated region
      $region29: #{tpu_custom_call.1} parent=5 // pred_check
        _
      $region30: #{tpu_custom_call.1} parent=5 // pred_check_branch
        %165 = sbr.rel (%p162) target = $region32
      $region31: #{tpu_custom_call.1} parent=5 // pred_region
        %s166 = ssub.s32 %s12, 1
        %s167 = smul.u32 2, %s22
        %p168 = scmp.lt.s32.totalorder %s21, 1
        %s169 = scalar_select %p168, %s21, 1
        %p170 = scmp.lt.s32.totalorder %s167, 1
        %s171 = scalar_select %p170, %s167, 1
        %s172 = smul.addr %s169, 10
        %s173 = sadd.s32 %s171, %s172
        %s174 = smul.addr %s173, 8
        %s175 = scalar_lea.vmem %s0, %s174
        %p176 = pneg %p52
        %p177 = pneg %p49
        %p178 = pneg %p73
        %p179 = pneg %p70
        %p180 = pneg %p94
        %p181 = pneg %p91
        %p182 = pneg %p122
        %p183 = pneg %p119
        %s184 = sand.u32 %s109, 1
        %s185 = scalar_lea.sflag [#allocation3], %s184
        %s186 = sand.u32 %s109, 1
        %s187 = smul.addr %s186, 16
        %s188 = scalar_lea.vmem [#allocation2], %s187
        %s189 = smul.u32 2, %s22
        %p190 = scmp.lt.s32.totalorder %s21, 1
        %s191 = scalar_select %p190, %s21, 1
        %p192 = scmp.lt.s32.totalorder %s189, 1
        %s193 = scalar_select %p192, %s189, 1
        %s194 = smul.addr %s191, 10
        %s195 = sadd.s32 %s193, %s194
        %s196 = smul.addr %s195, 8
        %s197 = scalar_lea.vmem %s0, %s196
        %s198 = smul.u32 2, %s22
        %s199 = smul.u32 2, %s22
        %v200 = vld [vmem:[%s1] sm:$0xff]
        %v201 = vld [vmem:[%s197] sm:$0xff]
        %v202 = vld [vmem:[%s197 + $0x8] sm:$0xff]
        %v203 = vld [vmem:[%s197 + $0x10] sm:$0xff]
        %v204 = vld [vmem:[%s197 + $0x18] sm:$0xff]
        %v205 = vld [vmem:[%s197 + $0x20] sm:$0xff]
        %v206 = vld [vmem:[%s197 + $0x28] sm:$0xff]
        %v207 = vld [vmem:[%s197 + $0x30] sm:$0xff]
        %v208 = vld [vmem:[%s197 + $0x38] sm:$0xff]
        %v209 = vld [vmem:[%s197 + $0x40] sm:$0xf]
        %v210 = vld [vmem:[%s197 + $0x48] sm:$0xf]
        %v211 = vld [vmem:[%s2] sm:$0xff]
        %213 = vset.pattern.permute.xlu0 0
        %214 = vperm.xlu0 %213, %v211
        %v215 = vpop.permute.xlu0 %214
        %vm217 = vcmask 293888
        %v219 = vsel %vm217, %v200, 0
        %vm221 = vcmask 1043456
        %v223 = vsel %vm221, %v209, 0
        %v226 = vsel %vm221, %v210, 0
        %228 = vmatprep.subr.mxu0 %v202
        %229 = vmatpush1.msra.mxu0 %v201
        %230 = vmatprep.subr.mxu0 %v204
        %231 = vmatpush1.msra.mxu0 %v203
        %232 = vmatprep.subr.mxu0 %v206
        %233 = vmatpush1.msra.mxu0 %v205
        %234 = vmatprep.subr.mxu0 %v208
        %235 = vmatpush1.msra.mxu0 %v207
        %236 = vmatprep.subr.mxu0 %v226
        %237 = vmatpush1.msra.mxu0 %v223
        %238 = vmatprep.subr.mxu0 0.0
        %239 = vmatpush1.msra.mxu0 0.0
        %240 = vmatprep.subr.mxu0 0.0
        %241 = vmatpush1.msra.mxu0 0.0
        %242 = vmatprep.subr.mxu0 0.0
        %243 = vmatpush1.msra.mxu0 0.0
        %244 = vmatprep.subr.mxu0 0.0
        %245 = vmatpush1.msra.mxu0 0.0
        %246 = vmatprep.subr.mxu0 0.0
        %247 = vmatpush1.msra.mxu0 0.0
        %248 = vmatprep.subr.mxu0 0.0
        %249 = vmatpush1.msra.mxu0 0.0
        %250 = vmatprep.subr.mxu0 0.0
        %251 = vmatpush1.msra.mxu0 0.0
        %252 = vmatprep.subr.mxu0 0.0
        %253 = vmatpush1.msra.mxu0 0.0
        %254 = vmatprep.subr.mxu0 0.0
        %255 = vmatpush1.msra.mxu0 0.0
        %256 = vmatprep.subr.mxu0 0.0
        %257 = vmatpush1.msra.mxu0 0.0
        %258 = vmatprep.subr.mxu0 0.0
        %259 = vmatpush1.msra.mxu0 0.0
        %260 = vmatprep.subr.mxu0 0.0
        %261 = vmatpush1.msra.mxu0 0.0
        %262 = vmatprep.subr.mxu0 0.0
        %263 = vmatpush1.msra.mxu0 0.0
        %264 = vmatprep.subr.mxu0 0.0
        %265 = vmatpush1.msra.mxu0 0.0
        %266 = vmatprep.subr.mxu0 0.0
        %267 = vmatpush1.msra.mxu0 0.0
        %268 = vmatprep.subr.mxu0 0.0
        %269 = vmatpush1.msra.mxu0 0.0
        %270 = vmatprep.subr.mxu0 0.0
        %271 = vmatpush1.msra.mxu0 0.0
        %272 = vmatprep.subr.mxu0 0.0
        %273 = vmatpush1.msra.mxu0 0.0
        %274 = vmatprep.subr.mxu0 0.0
        %275 = vmatpush1.msra.mxu0 0.0
        %276 = vmatprep.subr.mxu0 0.0
        %277 = vmatpush1.msra.mxu0 0.0
        %278 = vmatprep.subr.mxu0 0.0
        %279 = vmatpush1.msra.mxu0 0.0
        %280 = vmatprep.subr.mxu0 0.0
        %281 = vmatpush1.msra.mxu0 0.0
        %282 = vmatprep.subr.mxu0 0.0
        %283 = vmatpush1.msra.mxu0 0.0
        %284 = vmatprep.subr.mxu0 0.0
        %285 = vmatpush1.msra.mxu0 0.0
        %286 = vmatprep.subr.mxu0 0.0
        %287 = vmatpush1.msra.mxu0 0.0
        %288 = vmatprep.subr.mxu0 0.0
        %289 = vmatpush1.msra.mxu0 0.0
        %290 = vmatprep.subr.mxu0 0.0
        %291 = vmatpush1.msra.mxu0 0.0
        %292 = vmatprep.mubr.f32.mxu0 0.0
        %293 = vmatmul.mubr.f32.gmra.mrb[0].mxu0 %v219
        %v294 = vpop.f32.mrb[0].mxu0
        %v295 = vadd.f32 %v215, %v294
        %v296 = vpop.f32.mrb[0].mxu0
        %v297 = vadd.f32 %v215, %v296
        %298 = vdwg.mxu0
        %v299 = vmax.f32 %v295, 0.0
        %v300 = vmax.f32 %v297, 0.0
        %301 = vst [vmem:[%s188] sm:$0xff] %v299
        %302 = vst [vmem:[%s188 + $0x8] sm:$0xff] %v300
        %s303 = sand.u32 %s109, 1
        %s304 = scalar_lea.sflag [#allocation3], %s303
        %s305 = sand.u32 %s109, 1
        %s306 = smul.addr %s305, 16
        %s307 = scalar_lea.vmem [#allocation2], %s306
        // Predicated region
        $region33: #{tpu_custom_call.1} parent=31 // pred_check
          %p308 = pneg %p119
        $region34: #{tpu_custom_call.1} parent=31 // pred_check_branch
          %310 = sbr.rel (%p308) target = $region36
        $region35: #{tpu_custom_call.1} parent=31 // pred_region
          %s311 = smul.u32 2, %s22
          %s313 = ssub.s32 256, 256
          %314 = vsyncadd %s304, %s313
          %s315 = smul.addr %s21, 2
          %s316 = sadd.s32 %s311, %s315
          %s317 = smul.addr %s316, 128
          %s318 = scalar_lea.hbm %s3, %s317
          %s320 = sshll.u32 %s307, 4
          %s321 = int_to_ptr.vmem [resolvable:$true] %s320
          %323 = dma.vmem_to_hbm [thread:$0]  %s321, 256, %s318, %s304
        $region36: #{tpu_custom_call.1} parent=31 // pred_fallthru
          _
      $region32: #{tpu_custom_call.1} parent=5 // pred_fallthru
        _
      %p324 = scmp.le.s32.totalorder 2, %s12
      // Predicated region
      $region37: #{tpu_custom_call.1} parent=5 // pred_check
        %p325 = pneg %p324
      $region38: #{tpu_custom_call.1} parent=5 // pred_check_branch
        %327 = sbr.rel (%p325) target = $region40
      $region39: #{tpu_custom_call.1} parent=5 // pred_region
        %s328 = ssub.s32 %s12, 2
        // Predicated region
        $region41: #{tpu_custom_call.1} parent=39 // pred_check
          %p329 = pneg %p125
        $region42: #{tpu_custom_call.1} parent=39 // pred_check_branch
          %331 = sbr.rel (%p329) target = $region44
        $region43: #{tpu_custom_call.1} parent=39 // pred_region
          %s332 = sand.u32 %s110, 1
          %s333 = scalar_lea.sflag [#allocation3], %s332
          %s334 = sand.u32 %s110, 1
          %s335 = smul.addr %s334, 16
          %s336 = scalar_lea.vmem [#allocation2], %s335
          %337 = dma.done %s333, 256
        $region44: #{tpu_custom_call.1} parent=39 // pred_fallthru
          _
      $region40: #{tpu_custom_call.1} parent=5 // pred_fallthru
        _
    $region6: #{tpu_custom_call.1} parent=1 // loop_footer
      %s16 = sadd.s32 1, %s12
    $region7: #{tpu_custom_call.1} parent=1 // loop_footer_branch
      %11 = sbr.rel target = $region3
    $region8: #{tpu_custom_call.1} parent=1 // loop_exit
      _
    %338 = vsyncpa [#allocation3], 1
    %s339 = scalar_lea.sflag [#allocation3], 1
    %340 = vsyncpa %s339, 1

</llo_original>
